<compile_context>
chip_gen: v7x
topology: tpu7x:2x2x1
jax: 0.10.0
libtpu: 0.0.40
codegen_flags: <defaults>
</compile_context>

<pallas_src>
import jax
import jax.numpy as jnp
from jax.experimental import pallas as pl
from jax.experimental.pallas import tpu as pltpu


INPUT_DIM = 2
OUTPUT_DIM = 2
HIDDEN = 256
W3_PAD = 8             # layer-3 weight columns padded 2 -> 8 (weight-side only)
NEG_SLOPE = 0.2        # LeakyReLU(0.2)


def _leaky_relu(x, slope=NEG_SLOPE):
    # slope < 1  =>  max(x, slope*x) == leaky_relu(x); cheaper than where().
    return jnp.maximum(x, slope * x)


def generator_kernel(x_ref, w1_ref, b1_ref, w2_ref, b2_ref, w3_ref, b3_ref, o_ref):
    """Whole-MLP forward for one batch tile.

    x_ref  : [tb, 2]          f32
    w1_ref : [2, 256]         f32        b1_ref : [1, 256]    f32
    w2_ref : [256, 256]       f32/bf16   b2_ref : [1, 256]    f32
    w3_ref : [256, 8] (pad)   f32/bf16   b3_ref : [1, 8](pad) f32
    o_ref  : [tb, 2]          f32
    """
    x = x_ref[...]                                   # [tb, 2] f32
    w1 = w1_ref[...]                                 # [2, 256] f32

    # --- Layer 1 (K=2): broadcast-FMA on the VPU; a K=2 MXU matmul would waste the array.
    h1 = (x[:, 0:1] * w1[0:1, :]
          + x[:, 1:2] * w1[1:2, :]
          + b1_ref[...])                             # [tb, 256] f32
    h1 = _leaky_relu(h1)

    # --- Layer 2 (256x256): the main MXU matmul. Operands may be bf16; accumulate f32.
    h2 = jnp.dot(h1.astype(w2_ref.dtype), w2_ref[...],
                 preferred_element_type=jnp.float32) + b2_ref[...]
    h2 = _leaky_relu(h2)

    # --- Layer 3: padded (256,8) weight; store only the real OUTPUT_DIM columns, so HBM
    # writeback is exactly (tb, 2) and the wrapper needs no slice pass.
    out = jnp.dot(h2.astype(w3_ref.dtype), w3_ref[...],
                  preferred_element_type=jnp.float32) + b3_ref[...]   # [tb, 8] f32
    o_ref[...] = out[:, :OUTPUT_DIM].astype(o_ref.dtype)


def _is_v7x():
    """Trace-time chip-generation sniff; only used to tune the tile/step policy."""
    try:
        kind = jax.devices()[0].device_kind.lower()
    except Exception:
        return False
    return ("v7" in kind) or ("7x" in kind)


def _pick_tb(B, *, max_tb=2048, min_steps=1, even_steps=False):
    """Largest batch tile that divides B, is a multiple of 8, is <= max_tb, and yields
    at least `min_steps` (optionally an even number of) grid steps.  Falls back to a
    single tile when B is tiny/unaligned or the constraints can't be met."""
    if B <= 8 or B % 8 != 0:
        return B
    cap = min(max_tb, B)
    if min_steps > 1:
        cap = min(cap, B // min_steps)
    cap = max(8, (cap // 8) * 8)
    for tb in range(cap, 7, -8):
        if B % tb:
            continue
        steps = B // tb
        if steps < min_steps:
            continue
        if even_steps and steps > 1 and steps % 2:
            continue
        return tb
    return B


def generator_forward(x, params, *, tb=None, matmul_dtype=jnp.bfloat16):
    """x: [B, INPUT_DIM] float32. params: dict of f32 weights/biases.

    matmul_dtype: jnp.bfloat16 (default; MXU-native, f32 accumulation) or jnp.float32
    (debug/reference mode).  Elementwise math is always f32.
    """
    B, D_in = x.shape
    assert D_in == INPUT_DIM
    if tb is None:
        if _is_v7x():
            # 2 TensorCores: want an even number of steps, >=4 when B permits, so each
            # core gets >=2 steps and its x/out DMAs overlap with compute.
            tb = _pick_tb(B, min_steps=4, even_steps=True)
        else:
            # Single-TC chips (v5e/v6e): fewest steps that fit.  tb <= 2048 keeps the
            # per-step footprint well inside v5e's 16 MiB default scoped-VMEM limit.
            tb = _pick_tb(B)
    assert B % tb == 0
    if tb < B:
        assert tb % 8 == 0, "partial batch tiles must be a multiple of 8 (sublane alignment)"

    x = x.astype(jnp.float32)
    w1 = params["w1"].astype(jnp.float32)
    b1 = params["b1"].astype(jnp.float32)
    w2 = params["w2"].astype(matmul_dtype)
    b2 = params["b2"].astype(jnp.float32)
    # Pad only the layer-3 weight/bias columns (2 -> 8); zeros keep the real columns exact.
    w3_pad = jnp.zeros((HIDDEN, W3_PAD), matmul_dtype).at[:, :OUTPUT_DIM].set(
        params["w3"].astype(matmul_dtype))
    b3_pad = jnp.zeros((1, W3_PAD), jnp.float32).at[:, :OUTPUT_DIM].set(
        params["b3"].astype(jnp.float32))

    grid = (B // tb,)

    in_specs = [
        pl.BlockSpec((tb, INPUT_DIM), lambda i: (i, 0)),       # x (batch-tiled)
        pl.BlockSpec((INPUT_DIM, HIDDEN), lambda i: (0, 0)),   # w1 (resident)
        pl.BlockSpec((1, HIDDEN), lambda i: (0, 0)),           # b1
        pl.BlockSpec((HIDDEN, HIDDEN), lambda i: (0, 0)),      # w2
        pl.BlockSpec((1, HIDDEN), lambda i: (0, 0)),           # b2
        pl.BlockSpec((HIDDEN, W3_PAD), lambda i: (0, 0)),      # w3 (col-padded)
        pl.BlockSpec((1, W3_PAD), lambda i: (0, 0)),           # b3 (col-padded)
    ]
    # Last block dim == full array dim (2), so the narrow output block is legal.
    out_spec = pl.BlockSpec((tb, OUTPUT_DIM), lambda i: (i, 0))

    itemsize = jnp.dtype(matmul_dtype).itemsize
    flops = 2 * B * (INPUT_DIM * HIDDEN + HIDDEN * HIDDEN + HIDDEN * W3_PAD)
    bytes_accessed = (
        B * INPUT_DIM * 4                                # x
        + INPUT_DIM * HIDDEN * 4 + HIDDEN * 4            # w1, b1
        + HIDDEN * HIDDEN * itemsize + HIDDEN * 4        # w2, b2
        + HIDDEN * W3_PAD * itemsize + W3_PAD * 4        # w3, b3
        + B * OUTPUT_DIM * 4                             # out (true width)
    )

    return pl.pallas_call(
        generator_kernel,
        out_shape=jax.ShapeDtypeStruct((B, OUTPUT_DIM), jnp.float32),
        grid_spec=pltpu.PrefetchScalarGridSpec(
            num_scalar_prefetch=0,
            grid=grid,
            in_specs=in_specs,
            out_specs=out_spec,
        ),
        compiler_params=pltpu.CompilerParams(
            dimension_semantics=("parallel",),   # batch tiles shard across v7x's 2 TCs
        ),
        cost_estimate=pl.CostEstimate(
            flops=flops, transcendentals=0, bytes_accessed=bytes_accessed),
    )(x, w1, b1, w2, b2, w3_pad, b3_pad)


def init_params(key):
    """Deterministic init mimicking PyTorch Linear default (uniform +/- 1/sqrt(fan_in))."""
    ks = jax.random.split(key, 6)

    def linear(kw, kb, fan_in, fan_out):
        bound = 1.0 / jnp.sqrt(fan_in)
        w = jax.random.uniform(kw, (fan_in, fan_out), jnp.float32, -bound, bound)
        b = jax.random.uniform(kb, (1, fan_out), jnp.float32, -bound, bound)
        return w, b

    w1, b1 = linear(ks[0], ks[1], INPUT_DIM, HIDDEN)
    w2, b2 = linear(ks[2], ks[3], HIDDEN, HIDDEN)
    w3, b3 = linear(ks[4], ks[5], HIDDEN, OUTPUT_DIM)
    return {"w1": w1, "b1": b1, "w2": w2, "b2": b2, "w3": w3, "b3": b3}


def reference_forward(x, p):
    h1 = _leaky_relu(x @ p["w1"] + p["b1"])
    h2 = _leaky_relu(h1 @ p["w2"] + p["b2"])
    return h2 @ p["w3"] + p["b3"]


if __name__ == "__main__":
    key = jax.random.PRNGKey(0)
    k_params, k_x = jax.random.split(key)

    params = init_params(k_params)

    # Small-shape check (batch=8), full-f32 debug path, strict tolerance vs pure-JAX reference.
    x = jax.random.normal(k_x, (8, INPUT_DIM), jnp.float32)
    out = jax.block_until_ready(generator_forward(x, params, matmul_dtype=jnp.float32))
    ref = reference_forward(x, params)
    assert out.shape == (8, OUTPUT_DIM)
    assert jnp.allclose(out, ref, atol=1e-5, rtol=1e-5), "f32 kernel mismatch vs reference"

    # Larger batch exercising the tiled grid and the default bf16 matmul operands
    # (f32 accumulation), looser tolerance appropriate for bf16 operands.
    xb = jax.random.normal(k_x, (1024, INPUT_DIM), jnp.float32)
    out_bf = jax.block_until_ready(generator_forward(xb, params))
    ref_b = reference_forward(xb, params)
    assert out_bf.shape == (1024, OUTPUT_DIM)
    assert jnp.allclose(out_bf, ref_b, atol=5e-2, rtol=5e-2), "bf16 kernel mismatch"

    print("KERNEL_OK")
</pallas_src>

<mosaic_0001>
module attributes {stable_mosaic.version = 11 : i64} {
  func.func @generator_kernel(%arg0: i32, %arg1: memref<8x2xf32, #tpu.memory_space<vmem>>, %arg2: memref<2x256xf32, #tpu.memory_space<vmem>>, %arg3: memref<1x256xf32, #tpu.memory_space<vmem>>, %arg4: memref<256x256xf32, #tpu.memory_space<vmem>>, %arg5: memref<1x256xf32, #tpu.memory_space<vmem>>, %arg6: memref<256x8xf32, #tpu.memory_space<vmem>>, %arg7: memref<1x8xf32, #tpu.memory_space<vmem>>, %arg8: memref<8x2xf32, #tpu.memory_space<vmem>>) attributes {dimension_semantics = [#tpu.dimension_semantics<parallel>], iteration_bounds = array<i64: 1>, scalar_prefetch = 0 : i64, scratch_operands = 0 : i64, tpu.core_type = #tpu.core_type<tc>, window_params = [{transform_indices = @transform_0, window_bounds = array<i64: 8, 2>}, {pipeline_mode = #tpu.pipeline_mode<synchronous>, transform_indices = @transform_1, window_bounds = array<i64: 2, 256>}, {pipeline_mode = #tpu.pipeline_mode<synchronous>, transform_indices = @transform_2, window_bounds = array<i64: 1, 256>}, {pipeline_mode = #tpu.pipeline_mode<synchronous>, transform_indices = @transform_3, window_bounds = array<i64: 256, 256>}, {pipeline_mode = #tpu.pipeline_mode<synchronous>, transform_indices = @transform_4, window_bounds = array<i64: 1, 256>}, {pipeline_mode = #tpu.pipeline_mode<synchronous>, transform_indices = @transform_5, window_bounds = array<i64: 256, 8>}, {pipeline_mode = #tpu.pipeline_mode<synchronous>, transform_indices = @transform_6, window_bounds = array<i64: 1, 8>}, {transform_indices = @transform_7, window_bounds = array<i64: 8, 2>}]} {
    %c0 = arith.constant 0 : index
    %c0_0 = arith.constant 0 : index
    %0 = vector.load %arg1[%c0, %c0_0] : memref<8x2xf32, #tpu.memory_space<vmem>>, vector<8x2xf32>
    %c0_1 = arith.constant 0 : index
    %c0_2 = arith.constant 0 : index
    %1 = vector.load %arg2[%c0_1, %c0_2] : memref<2x256xf32, #tpu.memory_space<vmem>>, vector<2x256xf32>
    %2 = vector.extract_strided_slice %0 {offsets = [0, 0], sizes = [8, 1], strides = [1, 1]} : vector<8x2xf32> to vector<8x1xf32>
    %3 = vector.extract_strided_slice %1 {offsets = [0, 0], sizes = [1, 256], strides = [1, 1]} : vector<2x256xf32> to vector<1x256xf32>
    %4 = vector.broadcast %2 : vector<8x1xf32> to vector<8x256xf32>
    %5 = vector.broadcast %3 : vector<1x256xf32> to vector<8x256xf32>
    %6 = arith.mulf %4, %5 : vector<8x256xf32>
    %7 = vector.extract_strided_slice %0 {offsets = [0, 1], sizes = [8, 1], strides = [1, 1]} : vector<8x2xf32> to vector<8x1xf32>
    %8 = vector.extract_strided_slice %1 {offsets = [1, 0], sizes = [1, 256], strides = [1, 1]} : vector<2x256xf32> to vector<1x256xf32>
    %9 = vector.broadcast %7 : vector<8x1xf32> to vector<8x256xf32>
    %10 = vector.broadcast %8 : vector<1x256xf32> to vector<8x256xf32>
    %11 = arith.mulf %9, %10 : vector<8x256xf32>
    %12 = arith.addf %6, %11 : vector<8x256xf32>
    %c0_3 = arith.constant 0 : index
    %c0_4 = arith.constant 0 : index
    %13 = vector.load %arg3[%c0_3, %c0_4] : memref<1x256xf32, #tpu.memory_space<vmem>>, vector<1x256xf32>
    %14 = vector.broadcast %13 : vector<1x256xf32> to vector<8x256xf32>
    %15 = arith.addf %12, %14 : vector<8x256xf32>
    %cst = arith.constant 2.000000e-01 : f32
    %16 = vector.broadcast %cst : f32 to vector<8x256xf32>
    %17 = arith.mulf %16, %15 : vector<8x256xf32>
    %18 = arith.maximumf %15, %17 : vector<8x256xf32>
    %c0_5 = arith.constant 0 : index
    %c0_6 = arith.constant 0 : index
    %19 = vector.load %arg4[%c0_5, %c0_6] : memref<256x256xf32, #tpu.memory_space<vmem>>, vector<256x256xf32>
    %cst_7 = arith.constant dense<0.000000e+00> : vector<8x256xf32>
    %20 = tpu.matmul %18, %19, %cst_7 {dimension_numbers = #tpu.dot_dimension_numbers<[1], [0], [0], [1], [0, 0, 1, 1], [], []>} : vector<8x256xf32>, vector<256x256xf32>, vector<8x256xf32> -> vector<8x256xf32>
    %c0_8 = arith.constant 0 : index
    %c0_9 = arith.constant 0 : index
    %21 = vector.load %arg5[%c0_8, %c0_9] : memref<1x256xf32, #tpu.memory_space<vmem>>, vector<1x256xf32>
    %22 = vector.broadcast %21 : vector<1x256xf32> to vector<8x256xf32>
    %23 = arith.addf %20, %22 : vector<8x256xf32>
    %cst_10 = arith.constant 2.000000e-01 : f32
    %24 = vector.broadcast %cst_10 : f32 to vector<8x256xf32>
    %25 = arith.mulf %24, %23 : vector<8x256xf32>
    %26 = arith.maximumf %23, %25 : vector<8x256xf32>
    %c0_11 = arith.constant 0 : index
    %c0_12 = arith.constant 0 : index
    %27 = vector.load %arg6[%c0_11, %c0_12] : memref<256x8xf32, #tpu.memory_space<vmem>>, vector<256x8xf32>
    %cst_13 = arith.constant dense<0.000000e+00> : vector<8x8xf32>
    %28 = tpu.matmul %26, %27, %cst_13 {dimension_numbers = #tpu.dot_dimension_numbers<[1], [0], [0], [1], [0, 0, 1, 1], [], []>} : vector<8x256xf32>, vector<256x8xf32>, vector<8x8xf32> -> vector<8x8xf32>
    %c0_14 = arith.constant 0 : index
    %c0_15 = arith.constant 0 : index
    %29 = vector.load %arg7[%c0_14, %c0_15] : memref<1x8xf32, #tpu.memory_space<vmem>>, vector<1x8xf32>
    %30 = vector.broadcast %29 : vector<1x8xf32> to vector<8x8xf32>
    %31 = arith.addf %28, %30 : vector<8x8xf32>
    %32 = vector.extract_strided_slice %31 {offsets = [0, 0], sizes = [8, 2], strides = [1, 1]} : vector<8x8xf32> to vector<8x2xf32>
    %c0_16 = arith.constant 0 : index
    %c0_17 = arith.constant 0 : index
    %33 = vector.load %arg8[%c0_16, %c0_17] : memref<8x2xf32, #tpu.memory_space<vmem>>, vector<8x2xf32>
    tpu.vector_store %arg8[%c0_16, %c0_17], %32 {strides = array<i32>} : memref<8x2xf32, #tpu.memory_space<vmem>>, vector<8x2xf32>,
    return
  }
  func.func @transform_0(%arg0: i32) -> (i32, i32) {
    %c0_i32 = arith.constant 0 : i32
    %c0_i32_0 = arith.constant 0 : i32
    return %arg0, %c0_i32 : i32, i32
  }
  func.func @transform_1(%arg0: i32) -> (i32, i32) {
    %c0_i32 = arith.constant 0 : i32
    %c0_i32_0 = arith.constant 0 : i32
    %c0_i32_1 = arith.constant 0 : i32
    return %c0_i32, %c0_i32_0 : i32, i32
  }
  func.func @transform_2(%arg0: i32) -> (i32, i32) {
    %c0_i32 = arith.constant 0 : i32
    %c0_i32_0 = arith.constant 0 : i32
    %c0_i32_1 = arith.constant 0 : i32
    return %c0_i32, %c0_i32_0 : i32, i32
  }
  func.func @transform_3(%arg0: i32) -> (i32, i32) {
    %c0_i32 = arith.constant 0 : i32
    %c0_i32_0 = arith.constant 0 : i32
    %c0_i32_1 = arith.constant 0 : i32
    return %c0_i32, %c0_i32_0 : i32, i32
  }
  func.func @transform_4(%arg0: i32) -> (i32, i32) {
    %c0_i32 = arith.constant 0 : i32
    %c0_i32_0 = arith.constant 0 : i32
    %c0_i32_1 = arith.constant 0 : i32
    return %c0_i32, %c0_i32_0 : i32, i32
  }
  func.func @transform_5(%arg0: i32) -> (i32, i32) {
    %c0_i32 = arith.constant 0 : i32
    %c0_i32_0 = arith.constant 0 : i32
    %c0_i32_1 = arith.constant 0 : i32
    return %c0_i32, %c0_i32_0 : i32, i32
  }
  func.func @transform_6(%arg0: i32) -> (i32, i32) {
    %c0_i32 = arith.constant 0 : i32
    %c0_i32_0 = arith.constant 0 : i32
    %c0_i32_1 = arith.constant 0 : i32
    return %c0_i32, %c0_i32_0 : i32, i32
  }
  func.func @transform_7(%arg0: i32) -> (i32, i32) {
    %c0_i32 = arith.constant 0 : i32
    %c0_i32_0 = arith.constant 0 : i32
    return %arg0, %c0_i32 : i32, i32
  }
}

</mosaic_0001>

<llo_original>
// kernel: tpu_custom_call.1
$region0: #{tpu_custom_call.1}
  #allocation0 [shape = 'u32[]', space=smem, size = 0x4, offset = 0x4, fixed_abs, tag = 'smem constant byte address 0x4 - core index']
  #allocation1 [shape = 'u32[144,128]{1,0:T(1,128)}', space=vmem, size = 0x12000, scoped, tag = 'internal scratch']
  %s0 = inlined_call_operand.vmem [shape: f32[8,2], index: 0, kind: input, shape index: {}]
  %s1 = inlined_call_operand.vmem [shape: f32[2,256], index: 1, kind: input, shape index: {}]
  %s2 = inlined_call_operand.vmem [shape: f32[1,256], index: 2, kind: input, shape index: {}]
  %s3 = inlined_call_operand.hbm [shape: f32[256,256], index: 3, kind: input, shape index: {}]
  %s4 = inlined_call_operand.vmem [shape: f32[1,256], index: 4, kind: input, shape index: {}]
  %s5 = inlined_call_operand.vmem [shape: f32[256,8], index: 5, kind: input, shape index: {}]
  %s6 = inlined_call_operand.vmem [shape: f32[1,8], index: 6, kind: input, shape index: {}]
  %s7 = inlined_call_operand.vmem [shape: f32[8,2], index: 7, kind: output, shape index: {}]
  %s8 = sld [smem:[#allocation0]]
  $region42: #{tpu_custom_call.1} parent=0
    _
  %s10 = ssub.s32 1, %s8
  %s11 = scalar_select 0, %s10, %s8
  $region1: #{tpu_custom_call.1} parent=0
    #allocation2 [shape = 'u8[262144]{0}', space=vmem, size = 0x40000, scoped, tag = 'input window, operand 3, single buffered']
    #allocation3 [shape = 's32[1]{0}', space=sflag, size = 0x4, scoped, tag = 'scoped memory for tpu_custom_call.1']
    %12 = vsyncpa [#allocation3], 0
    // Predicated region
    $region2: #{tpu_custom_call.1} parent=1 // pred_check
      _
    $region3: #{tpu_custom_call.1} parent=1 // pred_check_branch
      %14 = sbr.rel (0) target = $region5
    $region4: #{tpu_custom_call.1} parent=1 // pred_region
      _
    $region5: #{tpu_custom_call.1} parent=1 // pred_fallthru
      _
    // Predicated region
    $region6: #{tpu_custom_call.1} parent=1 // pred_check
      _
    $region7: #{tpu_custom_call.1} parent=1 // pred_check_branch
      %16 = sbr.rel (0) target = $region9
    $region8: #{tpu_custom_call.1} parent=1 // pred_region
      _
    $region9: #{tpu_custom_call.1} parent=1 // pred_fallthru
      _
    // Predicated region
    $region10: #{tpu_custom_call.1} parent=1 // pred_check
      _
    $region11: #{tpu_custom_call.1} parent=1 // pred_check_branch
      %18 = sbr.rel (0) target = $region13
    $region12: #{tpu_custom_call.1} parent=1 // pred_region
      _
    $region13: #{tpu_custom_call.1} parent=1 // pred_fallthru
      _
    // Predicated region
    $region14: #{tpu_custom_call.1} parent=1 // pred_check
      _
    $region15: #{tpu_custom_call.1} parent=1 // pred_check_branch
      %20 = sbr.rel (0) target = $region17
    $region16: #{tpu_custom_call.1} parent=1 // pred_region
      %s22 = ssub.s32 8192, 8192
      %23 = vsyncadd [#allocation3], %s22
      %s24 = sshll.u32 [#allocation2], 4
      %s25 = int_to_ptr.vmem [resolvable:$true] %s24
      %30 = dma.hbm_to_vmem [thread:$0]  %s3, 8192, %s25, [#allocation3], 256, 256, 16
    $region17: #{tpu_custom_call.1} parent=1 // pred_fallthru
      _
    // Predicated region
    $region18: #{tpu_custom_call.1} parent=1 // pred_check
      _
    $region19: #{tpu_custom_call.1} parent=1 // pred_check_branch
      %32 = sbr.rel (0) target = $region21
    $region20: #{tpu_custom_call.1} parent=1 // pred_region
      _
    $region21: #{tpu_custom_call.1} parent=1 // pred_fallthru
      _
    // Predicated region
    $region22: #{tpu_custom_call.1} parent=1 // pred_check
      _
    $region23: #{tpu_custom_call.1} parent=1 // pred_check_branch
      %34 = sbr.rel (0) target = $region25
    $region24: #{tpu_custom_call.1} parent=1 // pred_region
      _
    $region25: #{tpu_custom_call.1} parent=1 // pred_fallthru
      _
    // Predicated region
    $region26: #{tpu_custom_call.1} parent=1 // pred_check
      _
    $region27: #{tpu_custom_call.1} parent=1 // pred_check_branch
      %36 = sbr.rel (0) target = $region29
    $region28: #{tpu_custom_call.1} parent=1 // pred_region
      _
    $region29: #{tpu_custom_call.1} parent=1 // pred_fallthru
      _
    // Predicated region
    $region30: #{tpu_custom_call.1} parent=1 // pred_check
      _
    $region31: #{tpu_custom_call.1} parent=1 // pred_check_branch
      %38 = sbr.rel (0) target = $region33
    $region32: #{tpu_custom_call.1} parent=1 // pred_region
      %39 = dma.done [#allocation3], 8192
    $region33: #{tpu_custom_call.1} parent=1 // pred_fallthru
      _
    %v40 = vld [vmem:[%s0] sm:$0xff]
    %v41 = vld [vmem:[%s1] sm:$0xf]
    %43 = vset.pattern.permute.xlu0 0
    %44 = vperm.xlu0 %43, %v40
    %v45 = vpop.permute.xlu0 %44
    %v48 = vlaneseq
    %v49 = vshrl.u32 %v48, 7
    %v50 = vsub.s32 0, %v49
    %v51 = vrot.slane %v41, %v50
    %v52 = vlaneseq
    %v53 = vshrl.u32 %v52, 7
    %v54 = vsub.s32 2, %v53
    %v55 = vrot.slane %v41, %v54
    %v58 = vlaneseq
    %v59 = vshrl.u32 %v58, 7
    %v60 = vsub.s32 0, %v59
    %v61 = vrot.slane %v51, %v60
    %v62 = vlaneseq
    %v63 = vshrl.u32 %v62, 7
    %v64 = vsub.s32 0, %v63
    %v65 = vrot.slane %v55, %v64
    %v66 = vmul.f32 %v45, %v61
    %v67 = vmul.f32 %v45, %v65
    %68 = vset.pattern.permute.xlu0 1
    %69 = vperm.xlu0 %68, %v40
    %v70 = vpop.permute.xlu0 %69
    %v72 = vlaneseq
    %v73 = vshrl.u32 %v72, 7
    %v74 = vsub.s32 1, %v73
    %v75 = vrot.slane %v41, %v74
    %v76 = vlaneseq
    %v77 = vshrl.u32 %v76, 7
    %v78 = vsub.s32 3, %v77
    %v79 = vrot.slane %v41, %v78
    %v82 = vlaneseq
    %v83 = vshrl.u32 %v82, 7
    %v84 = vsub.s32 1, %v83
    %v85 = vrot.slane %v75, %v84
    %v86 = vlaneseq
    %v87 = vshrl.u32 %v86, 7
    %v88 = vsub.s32 1, %v87
    %v89 = vrot.slane %v79, %v88
    %v90 = vmul.f32 %v70, %v85
    %v91 = vmul.f32 %v70, %v89
    %v92 = vadd.f32 %v66, %v90
    %v93 = vadd.f32 %v67, %v91
    %v94 = vld [vmem:[%s2] sm:$0x3]
    %v96 = vlaneseq
    %v97 = vshrl.u32 %v96, 7
    %v98 = vsub.s32 0, %v97
    %v99 = vrot.slane %v94, %v98
    %v100 = vlaneseq
    %v101 = vshrl.u32 %v100, 7
    %v102 = vsub.s32 1, %v101
    %v103 = vrot.slane %v94, %v102
    %v106 = vadd.f32 %v92, %v99
    %v107 = vadd.f32 %v93, %v103
    %v108 = vmul.f32 %v106, 0.2
    %v109 = vmul.f32 %v107, 0.2
    %v110 = vmax.f32 %v106, %v108
    %v111 = vmax.f32 %v107, %v109
    %v112 = vld [vmem:[#allocation2] sm:$0xff]
    %v113 = vld [vmem:[#allocation2 + $0x8] sm:$0xff]
    %v114 = vld [vmem:[#allocation2 + $0x10] sm:$0xff]
    %v115 = vld [vmem:[#allocation2 + $0x18] sm:$0xff]
    %v116 = vld [vmem:[#allocation2 + $0x20] sm:$0xff]
    %v117 = vld [vmem:[#allocation2 + $0x28] sm:$0xff]
    %v118 = vld [vmem:[#allocation2 + $0x30] sm:$0xff]
    %v119 = vld [vmem:[#allocation2 + $0x38] sm:$0xff]
    %v120 = vld [vmem:[#allocation2 + $0x40] sm:$0xff]
    %v121 = vld [vmem:[#allocation2 + $0x48] sm:$0xff]
    %v122 = vld [vmem:[#allocation2 + $0x50] sm:$0xff]
    %v123 = vld [vmem:[#allocation2 + $0x58] sm:$0xff]
    %v124 = vld [vmem:[#allocation2 + $0x60] sm:$0xff]
    %v125 = vld [vmem:[#allocation2 + $0x68] sm:$0xff]
    %v126 = vld [vmem:[#allocation2 + $0x70] sm:$0xff]
    %v127 = vld [vmem:[#allocation2 + $0x78] sm:$0xff]
    %v128 = vld [vmem:[#allocation2 + $0x80] sm:$0xff]
    %v129 = vld [vmem:[#allocation2 + $0x88] sm:$0xff]
    %v130 = vld [vmem:[#allocation2 + $0x90] sm:$0xff]
    %v131 = vld [vmem:[#allocation2 + $0x98] sm:$0xff]
    %v132 = vld [vmem:[#allocation2 + $0xa0] sm:$0xff]
    %v133 = vld [vmem:[#allocation2 + $0xa8] sm:$0xff]
    %v134 = vld [vmem:[#allocation2 + $0xb0] sm:$0xff]
    %v135 = vld [vmem:[#allocation2 + $0xb8] sm:$0xff]
    %v136 = vld [vmem:[#allocation2 + $0xc0] sm:$0xff]
    %v137 = vld [vmem:[#allocation2 + $0xc8] sm:$0xff]
    %v138 = vld [vmem:[#allocation2 + $0xd0] sm:$0xff]
    %v139 = vld [vmem:[#allocation2 + $0xd8] sm:$0xff]
    %v140 = vld [vmem:[#allocation2 + $0xe0] sm:$0xff]
    %v141 = vld [vmem:[#allocation2 + $0xe8] sm:$0xff]
    %v142 = vld [vmem:[#allocation2 + $0xf0] sm:$0xff]
    %v143 = vld [vmem:[#allocation2 + $0xf8] sm:$0xff]
    %v144 = vld [vmem:[#allocation2 + $0x100] sm:$0xff]
    %v145 = vld [vmem:[#allocation2 + $0x108] sm:$0xff]
    %v146 = vld [vmem:[#allocation2 + $0x110] sm:$0xff]
    %v147 = vld [vmem:[#allocation2 + $0x118] sm:$0xff]
    %v148 = vld [vmem:[#allocation2 + $0x120] sm:$0xff]
    %v149 = vld [vmem:[#allocation2 + $0x128] sm:$0xff]
    %v150 = vld [vmem:[#allocation2 + $0x130] sm:$0xff]
    %v151 = vld [vmem:[#allocation2 + $0x138] sm:$0xff]
    %v152 = vld [vmem:[#allocation2 + $0x140] sm:$0xff]
    %v153 = vld [vmem:[#allocation2 + $0x148] sm:$0xff]
    %v154 = vld [vmem:[#allocation2 + $0x150] sm:$0xff]
    %v155 = vld [vmem:[#allocation2 + $0x158] sm:$0xff]
    %v156 = vld [vmem:[#allocation2 + $0x160] sm:$0xff]
    %v157 = vld [vmem:[#allocation2 + $0x168] sm:$0xff]
    %v158 = vld [vmem:[#allocation2 + $0x170] sm:$0xff]
    %v159 = vld [vmem:[#allocation2 + $0x178] sm:$0xff]
    %v160 = vld [vmem:[#allocation2 + $0x180] sm:$0xff]
    %v161 = vld [vmem:[#allocation2 + $0x188] sm:$0xff]
    %v162 = vld [vmem:[#allocation2 + $0x190] sm:$0xff]
    %v163 = vld [vmem:[#allocation2 + $0x198] sm:$0xff]
    %v164 = vld [vmem:[#allocation2 + $0x1a0] sm:$0xff]
    %v165 = vld [vmem:[#allocation2 + $0x1a8] sm:$0xff]
    %v166 = vld [vmem:[#allocation2 + $0x1b0] sm:$0xff]
    %v167 = vld [vmem:[#allocation2 + $0x1b8] sm:$0xff]
    %v168 = vld [vmem:[#allocation2 + $0x1c0] sm:$0xff]
    %v169 = vld [vmem:[#allocation2 + $0x1c8] sm:$0xff]
    %v170 = vld [vmem:[#allocation2 + $0x1d0] sm:$0xff]
    %v171 = vld [vmem:[#allocation2 + $0x1d8] sm:$0xff]
    %v172 = vld [vmem:[#allocation2 + $0x1e0] sm:$0xff]
    %v173 = vld [vmem:[#allocation2 + $0x1e8] sm:$0xff]
    %v174 = vld [vmem:[#allocation2 + $0x1f0] sm:$0xff]
    %v175 = vld [vmem:[#allocation2 + $0x1f8] sm:$0xff]
    %v176 = vld [vmem:[%s4] sm:$0x3]
    %v178 = vlaneseq
    %v179 = vshrl.u32 %v178, 7
    %v180 = vsub.s32 0, %v179
    %v181 = vrot.slane %v176, %v180
    %v182 = vlaneseq
    %v183 = vshrl.u32 %v182, 7
    %v184 = vsub.s32 1, %v183
    %v185 = vrot.slane %v176, %v184
    %188 = vmatprep.subr.mxu0 %v113
    %189 = vmatpush1.msra.mxu0 %v112
    %190 = vmatprep.subr.mxu0 %v115
    %191 = vmatpush1.msra.mxu0 %v114
    %192 = vmatprep.subr.mxu0 %v117
    %193 = vmatpush1.msra.mxu0 %v116
    %194 = vmatprep.subr.mxu0 %v119
    %195 = vmatpush1.msra.mxu0 %v118
    %196 = vmatprep.subr.mxu0 %v121
    %197 = vmatpush1.msra.mxu0 %v120
    %198 = vmatprep.subr.mxu0 %v123
    %199 = vmatpush1.msra.mxu0 %v122
    %200 = vmatprep.subr.mxu0 %v125
    %201 = vmatpush1.msra.mxu0 %v124
    %202 = vmatprep.subr.mxu0 %v127
    %203 = vmatpush1.msra.mxu0 %v126
    %204 = vmatprep.subr.mxu0 %v129
    %205 = vmatpush1.msra.mxu0 %v128
    %206 = vmatprep.subr.mxu0 %v131
    %207 = vmatpush1.msra.mxu0 %v130
    %208 = vmatprep.subr.mxu0 %v133
    %209 = vmatpush1.msra.mxu0 %v132
    %210 = vmatprep.subr.mxu0 %v135
    %211 = vmatpush1.msra.mxu0 %v134
    %212 = vmatprep.subr.mxu0 %v137
    %213 = vmatpush1.msra.mxu0 %v136
    %214 = vmatprep.subr.mxu0 %v139
    %215 = vmatpush1.msra.mxu0 %v138
    %216 = vmatprep.subr.mxu0 %v141
    %217 = vmatpush1.msra.mxu0 %v140
    %218 = vmatprep.subr.mxu0 %v143
    %219 = vmatpush1.msra.mxu0 %v142
    %220 = vmatprep.subr.mxu0 %v145
    %221 = vmatpush1.msra.mxu0 %v144
    %222 = vmatprep.subr.mxu0 %v147
    %223 = vmatpush1.msra.mxu0 %v146
    %224 = vmatprep.subr.mxu0 %v149
    %225 = vmatpush1.msra.mxu0 %v148
    %226 = vmatprep.subr.mxu0 %v151
    %227 = vmatpush1.msra.mxu0 %v150
    %228 = vmatprep.subr.mxu0 %v153
    %229 = vmatpush1.msra.mxu0 %v152
    %230 = vmatprep.subr.mxu0 %v155
    %231 = vmatpush1.msra.mxu0 %v154
    %232 = vmatprep.subr.mxu0 %v157
    %233 = vmatpush1.msra.mxu0 %v156
    %234 = vmatprep.subr.mxu0 %v159
    %235 = vmatpush1.msra.mxu0 %v158
    %236 = vmatprep.subr.mxu0 %v161
    %237 = vmatpush1.msra.mxu0 %v160
    %238 = vmatprep.subr.mxu0 %v163
    %239 = vmatpush1.msra.mxu0 %v162
    %240 = vmatprep.subr.mxu0 %v165
    %241 = vmatpush1.msra.mxu0 %v164
    %242 = vmatprep.subr.mxu0 %v167
    %243 = vmatpush1.msra.mxu0 %v166
    %244 = vmatprep.subr.mxu0 %v169
    %245 = vmatpush1.msra.mxu0 %v168
    %246 = vmatprep.subr.mxu0 %v171
    %247 = vmatpush1.msra.mxu0 %v170
    %248 = vmatprep.subr.mxu0 %v173
    %249 = vmatpush1.msra.mxu0 %v172
    %250 = vmatprep.subr.mxu0 %v175
    %251 = vmatpush1.msra.mxu0 %v174
    %252 = vmatprep.mubr.f32.mxu0 %v111
    %253 = vmatmul.mubr.f32.gmra.mrb[0].mxu0 %v110
    %v254 = vpop.f32.mrb[0].mxu0
    %v255 = vadd.f32 %v181, %v254
    %v256 = vpop.f32.mrb[0].mxu0
    %v257 = vadd.f32 %v185, %v256
    %258 = vdwg.mxu0
    %v259 = vmul.f32 %v255, 0.2
    %v260 = vmul.f32 %v257, 0.2
    %v261 = vmax.f32 %v255, %v259
    %v262 = vmax.f32 %v257, %v260
    %v263 = vld [vmem:[%s5] sm:$0xff]
    %v264 = vld [vmem:[%s5 + $0x8] sm:$0xff]
    %v265 = vld [vmem:[%s5 + $0x10] sm:$0xff]
    %v266 = vld [vmem:[%s5 + $0x18] sm:$0xff]
    %v267 = vld [vmem:[%s5 + $0x20] sm:$0xff]
    %v268 = vld [vmem:[%s5 + $0x28] sm:$0xff]
    %v269 = vld [vmem:[%s5 + $0x30] sm:$0xff]
    %v270 = vld [vmem:[%s5 + $0x38] sm:$0xff]
    %v271 = vld [vmem:[%s5 + $0x40] sm:$0xff]
    %v272 = vld [vmem:[%s5 + $0x48] sm:$0xff]
    %v273 = vld [vmem:[%s5 + $0x50] sm:$0xff]
    %v274 = vld [vmem:[%s5 + $0x58] sm:$0xff]
    %v275 = vld [vmem:[%s5 + $0x60] sm:$0xff]
    %v276 = vld [vmem:[%s5 + $0x68] sm:$0xff]
    %v277 = vld [vmem:[%s5 + $0x70] sm:$0xff]
    %v278 = vld [vmem:[%s5 + $0x78] sm:$0xff]
    %v279 = vld [vmem:[%s5 + $0x80] sm:$0xff]
    %v280 = vld [vmem:[%s5 + $0x88] sm:$0xff]
    %v281 = vld [vmem:[%s5 + $0x90] sm:$0xff]
    %v282 = vld [vmem:[%s5 + $0x98] sm:$0xff]
    %v283 = vld [vmem:[%s5 + $0xa0] sm:$0xff]
    %v284 = vld [vmem:[%s5 + $0xa8] sm:$0xff]
    %v285 = vld [vmem:[%s5 + $0xb0] sm:$0xff]
    %v286 = vld [vmem:[%s5 + $0xb8] sm:$0xff]
    %v287 = vld [vmem:[%s5 + $0xc0] sm:$0xff]
    %v288 = vld [vmem:[%s5 + $0xc8] sm:$0xff]
    %v289 = vld [vmem:[%s5 + $0xd0] sm:$0xff]
    %v290 = vld [vmem:[%s5 + $0xd8] sm:$0xff]
    %v291 = vld [vmem:[%s5 + $0xe0] sm:$0xff]
    %v292 = vld [vmem:[%s5 + $0xe8] sm:$0xff]
    %v293 = vld [vmem:[%s5 + $0xf0] sm:$0xff]
    %v294 = vld [vmem:[%s5 + $0xf8] sm:$0xff]
    %v295 = vld [vmem:[%s6] sm:$0x1]
    %v297 = vlaneseq
    %v298 = vshrl.u32 %v297, 7
    %v299 = vsub.s32 0, %v298
    %v300 = vrot.slane %v295, %v299
    %302 = vmatprep.subr.mxu0 0.0
    %303 = vmatpush1.msra.mxu0 %v263
    %304 = vmatprep.subr.mxu0 0.0
    %305 = vmatpush1.msra.mxu0 %v264
    %306 = vmatprep.subr.mxu0 0.0
    %307 = vmatpush1.msra.mxu0 %v265
    %308 = vmatprep.subr.mxu0 0.0
    %309 = vmatpush1.msra.mxu0 %v266
    %310 = vmatprep.subr.mxu0 0.0
    %311 = vmatpush1.msra.mxu0 %v267
    %312 = vmatprep.subr.mxu0 0.0
    %313 = vmatpush1.msra.mxu0 %v268
    %314 = vmatprep.subr.mxu0 0.0
    %315 = vmatpush1.msra.mxu0 %v269
    %316 = vmatprep.subr.mxu0 0.0
    %317 = vmatpush1.msra.mxu0 %v270
    %318 = vmatprep.subr.mxu0 0.0
    %319 = vmatpush1.msra.mxu0 %v271
    %320 = vmatprep.subr.mxu0 0.0
    %321 = vmatpush1.msra.mxu0 %v272
    %322 = vmatprep.subr.mxu0 0.0
    %323 = vmatpush1.msra.mxu0 %v273
    %324 = vmatprep.subr.mxu0 0.0
    %325 = vmatpush1.msra.mxu0 %v274
    %326 = vmatprep.subr.mxu0 0.0
    %327 = vmatpush1.msra.mxu0 %v275
    %328 = vmatprep.subr.mxu0 0.0
    %329 = vmatpush1.msra.mxu0 %v276
    %330 = vmatprep.subr.mxu0 0.0
    %331 = vmatpush1.msra.mxu0 %v277
    %332 = vmatprep.subr.mxu0 0.0
    %333 = vmatpush1.msra.mxu0 %v278
    %334 = vmatprep.subr.mxu0 0.0
    %335 = vmatpush1.msra.mxu0 %v279
    %336 = vmatprep.subr.mxu0 0.0
    %337 = vmatpush1.msra.mxu0 %v280
    %338 = vmatprep.subr.mxu0 0.0
    %339 = vmatpush1.msra.mxu0 %v281
    %340 = vmatprep.subr.mxu0 0.0
    %341 = vmatpush1.msra.mxu0 %v282
    %342 = vmatprep.subr.mxu0 0.0
    %343 = vmatpush1.msra.mxu0 %v283
    %344 = vmatprep.subr.mxu0 0.0
    %345 = vmatpush1.msra.mxu0 %v284
    %346 = vmatprep.subr.mxu0 0.0
    %347 = vmatpush1.msra.mxu0 %v285
    %348 = vmatprep.subr.mxu0 0.0
    %349 = vmatpush1.msra.mxu0 %v286
    %350 = vmatprep.subr.mxu0 0.0
    %351 = vmatpush1.msra.mxu0 %v287
    %352 = vmatprep.subr.mxu0 0.0
    %353 = vmatpush1.msra.mxu0 %v288
    %354 = vmatprep.subr.mxu0 0.0
    %355 = vmatpush1.msra.mxu0 %v289
    %356 = vmatprep.subr.mxu0 0.0
    %357 = vmatpush1.msra.mxu0 %v290
    %358 = vmatprep.subr.mxu0 0.0
    %359 = vmatpush1.msra.mxu0 %v291
    %360 = vmatprep.subr.mxu0 0.0
    %361 = vmatpush1.msra.mxu0 %v292
    %362 = vmatprep.subr.mxu0 0.0
    %363 = vmatpush1.msra.mxu0 %v293
    %364 = vmatprep.subr.mxu0 0.0
    %365 = vmatpush1.msra.mxu0 %v294
    %366 = vmatprep.mubr.f32.mxu0 %v262
    %367 = vmatmul.mubr.f32.gmra.mrb[0].mxu0 %v261
    %v368 = vpop.f32.mrb[0].mxu0
    %v369 = vadd.f32 %v300, %v368
    %v370 = vpop.f32.mrb[0].mxu0
    %371 = vdwg.mxu0
    %vm372 = vcmask 15360
    %373 = vst.msk [vmem:[%s7] sm:$0xff] %vm372, %v369
    // Predicated region
    $region34: #{tpu_custom_call.1} parent=1 // pred_check
      _
    $region35: #{tpu_custom_call.1} parent=1 // pred_check_branch
      %375 = sbr.rel (0) target = $region37
    $region36: #{tpu_custom_call.1} parent=1 // pred_region
      _
    $region37: #{tpu_custom_call.1} parent=1 // pred_fallthru
      _
    // Predicated region
    $region38: #{tpu_custom_call.1} parent=1 // pred_check
      _
    $region39: #{tpu_custom_call.1} parent=1 // pred_check_branch
      %377 = sbr.rel (0) target = $region41
    $region40: #{tpu_custom_call.1} parent=1 // pred_region
      _
    $region41: #{tpu_custom_call.1} parent=1 // pred_fallthru
      _
    %378 = vsyncpa [#allocation3], 1

</llo_original>
